<compile_context>
chip_gen: v7x
topology: tpu7x:2x2x1
jax: 0.10.0
libtpu: 0.0.40
codegen_flags: <defaults>
</compile_context>

<pallas_src>
import numpy as np
import jax
import jax.numpy as jnp
from jax import lax
from jax.experimental import pallas as pl
from jax.experimental.pallas import tpu as pltpu


# ------------------------------ small helpers ------------------------------

def _round_up(v, m):
    return ((v + m - 1) // m) * m


def _hann_window(win_length):
    # torch.hann_window(win_length), periodic=True (default)
    n = np.arange(win_length)
    return 0.5 - 0.5 * np.cos(2.0 * np.pi * n / win_length)


def _make_fused_basis(fft_size, win_length, k_pad, f_pad):
    """(K_pad, 2*F_pad) [cos | sin] real-DFT basis, hann window folded in,
    zero-padded on both the K (fft sample) and F (freq bin) axes, bf16."""
    w = _hann_window(win_length)
    lpad = (fft_size - win_length) // 2            # torch.stft centers the window
    w_full = np.zeros(fft_size, dtype=np.float64)
    w_full[lpad:lpad + win_length] = w
    n_freq = fft_size // 2 + 1
    n = np.arange(fft_size)[:, None].astype(np.float64)
    k = np.arange(n_freq)[None, :].astype(np.float64)
    ang = 2.0 * np.pi * n * k / fft_size
    cos_b = w_full[:, None] * np.cos(ang)
    sin_b = -w_full[:, None] * np.sin(ang)
    basis = np.zeros((k_pad, 2 * f_pad), dtype=np.float32)
    basis[:fft_size, :n_freq] = cos_b
    basis[:fft_size, f_pad:f_pad + n_freq] = sin_b
    # bf16: native MXU input dtype on v5e/v6e/v7x; halves VMEM/HBM bytes.
    return jnp.asarray(basis).astype(jnp.bfloat16)


def _frame_signal(x, fft_size, hop):
    """center=True reflect padding + framing, matching torch.stft defaults."""
    pad = fft_size // 2
    xp = jnp.pad(x, ((0, 0), (pad, pad)), mode="reflect")
    n_frames = 1 + (xp.shape[1] - fft_size) // hop
    starts = np.arange(n_frames) * hop
    idx = starts[:, None] + np.arange(fft_size)[None, :]       # static indices
    frames = xp[:, idx]                                        # (rows, n_frames, fft)
    return frames.reshape(-1, fft_size), n_frames


# ------------------------------ Pallas kernel -------------------------------

def _make_fused_kernel(tm, f_pad, n_freq, m_valid):
    """Fused windowed-DFT magnitude + loss partial-sum kernel for one M tile."""

    def kernel(fxy_ref, basis_ref, out_ref):
        k_pad = fxy_ref.shape[-1]
        # Stacked x/y frame tile: (2, TM, K_pad) -> (2*TM, K_pad); one bf16 MXU
        # matmul per grid step for both signals, f32 accumulation.
        fxy = fxy_ref[...].reshape(2 * tm, k_pad)
        basis = basis_ref[...]                                  # resident weights
        p = jnp.dot(fxy, basis, preferred_element_type=jnp.float32)
        px, py = p[:tm, :], p[tm:, :]
        rex, imx = px[:, :f_pad], px[:, f_pad:]
        rey, imy = py[:, :f_pad], py[:, f_pad:]

        # torch: mag = sqrt(clamp(|X|, 1e-7)) = clamp(re^2+im^2, 1e-14)^(1/4).
        # Compute via exp(0.25*log(z)) so log(z) is reused by the L1-log term
        # (2 EUP ops per element per signal instead of 3).
        zx = jnp.maximum(rex * rex + imx * imx, 1e-14)
        zy = jnp.maximum(rey * rey + imy * imy, 1e-14)
        lzx = jnp.log(zx)
        lzy = jnp.log(zy)
        xmag = jnp.exp(0.25 * lzx)
        ymag = jnp.exp(0.25 * lzy)

        # Validity mask (padded freq columns / padded frame rows).  Only the
        # ||y||^2 term needs it: on padding zx == zy exactly (1e-14), so the
        # diff and log terms are exactly zero there.
        col = lax.broadcasted_iota(jnp.int32, (tm, f_pad), 1)
        row = (lax.broadcasted_iota(jnp.int32, (tm, f_pad), 0)
               + pl.program_id(0) * tm)
        valid = (col < n_freq) & (row < m_valid)

        d = ymag - xmag
        s_dd = jnp.sum(d * d)                                    # ||y-x||_F^2 part
        s_yy = jnp.sum(jnp.where(valid, ymag * ymag, 0.0))       # ||y||_F^2 part
        s_lg = 0.25 * jnp.sum(jnp.abs(lzy - lzx))                # L1(log) part

        # Lane-dense (8, 128) partial-sum tile: sums in lanes 0..2 of sublane 0.
        lane = lax.broadcasted_iota(jnp.int32, (8, 128), 1)
        sub = lax.broadcasted_iota(jnp.int32, (8, 128), 0)
        tile = jnp.where((sub == 0) & (lane == 0), s_dd,
               jnp.where((sub == 0) & (lane == 1), s_yy,
               jnp.where((sub == 0) & (lane == 2), s_lg, 0.0)))
        out_ref[0] = tile

    return kernel


def _stft_loss_sums(frames_xy, basis, n_freq, m_valid, tm):
    _, m_pad, k_pad = frames_xy.shape
    two_f_pad = basis.shape[1]
    f_pad = two_f_pad // 2
    num_tiles = m_pad // tm

    # Right-size the scoped VMEM limit from the actual buffer footprint:
    # 2x bf16 basis (pipeline copies) + 2x bf16 stacked frame tile buffers
    # + f32 matmul result + epilogue temporaries + headroom.
    basis_bytes = k_pad * two_f_pad * 2
    frame_buf_bytes = 2 * tm * k_pad * 2
    p_bytes = (2 * tm) * two_f_pad * 4
    temp_bytes = 10 * tm * f_pad * 4
    est = 2 * basis_bytes + 2 * frame_buf_bytes + p_bytes + temp_bytes + (2 << 20)
    vmem_limit = int(min(96 * 1024 * 1024, max(32 * 1024 * 1024, est)))

    partials = pl.pallas_call(
        _make_fused_kernel(tm, f_pad, n_freq, m_valid),
        out_shape=jax.ShapeDtypeStruct((num_tiles, 8, 128), jnp.float32),
        grid=(num_tiles,),
        in_specs=[
            pl.BlockSpec((2, tm, k_pad), lambda i: (0, i, 0)),    # stacked x/y frames
            pl.BlockSpec((k_pad, two_f_pad), lambda i: (0, 0)),   # fused basis (resident)
        ],
        out_specs=pl.BlockSpec((1, 8, 128), lambda i: (i, 0, 0)),
        compiler_params=pltpu.CompilerParams(
            dimension_semantics=("parallel",),
            vmem_limit_bytes=vmem_limit,
        ),
    )(frames_xy, basis)

    sums = jnp.sum(partials, axis=0)          # (8, 128)
    return sums[0, 0], sums[0, 1], sums[0, 2]


# ------------------------------ loss wrapper --------------------------------

class STFTLossPallas:
    """Pallas equivalent of STFTLoss(fft_size, shift_size, win_length, 'hann_window')."""

    def __init__(self, fft_size, shift_size, win_length):
        self.fft_size = fft_size
        self.shift_size = shift_size
        self.win_length = win_length
        self.n_freq = fft_size // 2 + 1
        self.k_pad = _round_up(fft_size, 128)           # lane-aligned MXU K dim
        self.f_pad = _round_up(self.n_freq, 128)        # lane-aligned MXU N dim
        self.basis = _make_fused_basis(fft_size, win_length, self.k_pad, self.f_pad)

    def __call__(self, x, y):
        b = x.shape[0]
        if x.shape == y.shape:
            # Frame both signals with one gather: stacked rows [x batches | y batches].
            sig = jnp.concatenate([x, y], axis=0)                    # (2B, T)
            frames, nf = _frame_signal(sig, self.fft_size, self.shift_size)
            m = b * nf
            frames_xy = frames.reshape(2, m, self.fft_size)          # (2, M, fft)
        else:
            fx, nfx = _frame_signal(x, self.fft_size, self.shift_size)
            fy, nfy = _frame_signal(y, self.fft_size, self.shift_size)
            if nfy != nfx:  # mirrors `y_mag = y_mag[:, :-1, :]` in the torch code
                if nfy < nfx:
                    raise ValueError("y produced fewer frames than x")
                fy = (fy.reshape(y.shape[0], nfy, self.fft_size)[:, :nfx, :]
                        .reshape(-1, self.fft_size))
            m = b * nfx
            frames_xy = jnp.stack([fx, fy])                          # (2, M, fft)

        # Frame-tile size: multiple of 16 (bf16 sublane packing), >=128 to keep
        # the MXU M dim full, 128 when M is small so v7x gets >= 2 grid tiles.
        tm = 256 if m > 256 else 128
        num_tiles = -(-m // tm)
        m_pad = num_tiles * tm

        # M/K zero-pad + bf16 cast fuse into one elementwise pass; for standard
        # fft sizes (512/1024/2048) the K pad is zero-width.
        frames_xy = jnp.pad(
            frames_xy,
            ((0, 0), (0, m_pad - m), (0, self.k_pad - self.fft_size)),
        ).astype(jnp.bfloat16)

        s_dd, s_yy, s_lg = _stft_loss_sums(frames_xy, self.basis, self.n_freq, m, tm)
        sc_loss = jnp.sqrt(s_dd) / jnp.sqrt(s_yy)        # frobenius-norm ratio
        mag_loss = s_lg / (m * self.n_freq)              # mean |log y - log x|
        return sc_loss, mag_loss


# ------------------------- pure-numpy reference ------------------------------

def _reference_loss(x, y, fft_size, hop, win_length):
    x = np.asarray(x, dtype=np.float64)
    y = np.asarray(y, dtype=np.float64)
    w = _hann_window(win_length)
    lpad = (fft_size - win_length) // 2
    w_full = np.zeros(fft_size)
    w_full[lpad:lpad + win_length] = w

    def mag(sig):
        pad = fft_size // 2
        sp = np.pad(sig, ((0, 0), (pad, pad)), mode="reflect")
        n_frames = 1 + (sp.shape[1] - fft_size) // hop
        frames = np.stack([sp[:, i * hop:i * hop + fft_size] for i in range(n_frames)],
                          axis=1)
        spec = np.fft.rfft(frames * w_full, n=fft_size, axis=-1)
        return np.sqrt(np.clip(np.abs(spec), 1e-7, None))

    xm, ym = mag(x), mag(y)
    if ym.shape != xm.shape:
        ym = ym[:, :-1, :]
    sc = np.linalg.norm(ym - xm) / np.linalg.norm(ym)
    mg = np.mean(np.abs(np.log(ym) - np.log(xm)))
    return sc, mg


# ----------------------------------- main ------------------------------------

if __name__ == "__main__":
    B, T = 2, 256
    fft_size, shift_size, win_length = 64, 16, 64

    key = jax.random.PRNGKey(0)
    kx, ky = jax.random.split(key)
    x = jax.random.normal(kx, (B, T), dtype=jnp.float32)
    y = jax.random.normal(ky, (B, T), dtype=jnp.float32)

    loss_fn = STFTLossPallas(fft_size, shift_size, win_length)
    sc_loss, mag_loss = jax.block_until_ready(loss_fn(x, y))

    sc_ref, mag_ref = _reference_loss(np.asarray(x), np.asarray(y),
                                      fft_size, shift_size, win_length)

    assert np.isfinite(float(sc_loss)) and np.isfinite(float(mag_loss))
    # bf16 MXU inputs + f32 accumulation: ~1e-3 relative error expected.
    assert np.allclose(float(sc_loss), sc_ref, rtol=2e-2, atol=2e-3), (sc_loss, sc_ref)
    assert np.allclose(float(mag_loss), mag_ref, rtol=2e-2, atol=2e-3), (mag_loss, mag_ref)
    print("KERNEL_OK")
</pallas_src>

<mosaic_0001>
module attributes {stable_mosaic.version = 11 : i64} {
  func.func @kernel(%arg0: i32, %arg1: memref<2x128x128xbf16, #tpu.memory_space<vmem>>, %arg2: memref<128x256xbf16, #tpu.memory_space<vmem>>, %arg3: memref<1x8x128xf32, #tpu.memory_space<vmem>>) attributes {dimension_semantics = [#tpu.dimension_semantics<parallel>], iteration_bounds = array<i64: 1>, scalar_prefetch = 0 : i64, scratch_operands = 0 : i64, tpu.core_type = #tpu.core_type<tc>, window_params = [{transform_indices = @transform_0, window_bounds = array<i64: 2, 128, 128>}, {pipeline_mode = #tpu.pipeline_mode<synchronous>, transform_indices = @transform_1, window_bounds = array<i64: 128, 256>}, {transform_indices = @transform_2, window_bounds = array<i64: 1, 8, 128>}]} {
    %c0 = arith.constant 0 : index
    %c0_0 = arith.constant 0 : index
    %c0_1 = arith.constant 0 : index
    %0 = vector.load %arg1[%c0, %c0_0, %c0_1] : memref<2x128x128xbf16, #tpu.memory_space<vmem>>, vector<2x128x128xbf16>
    %1 = vector.shape_cast %0 : vector<2x128x128xbf16> to vector<256x128xbf16>
    %c0_2 = arith.constant 0 : index
    %c0_3 = arith.constant 0 : index
    %2 = vector.load %arg2[%c0_2, %c0_3] : memref<128x256xbf16, #tpu.memory_space<vmem>>, vector<128x256xbf16>
    %cst = arith.constant dense<0.000000e+00> : vector<256x256xf32>
    %3 = tpu.matmul %1, %2, %cst {dimension_numbers = #tpu.dot_dimension_numbers<[1], [0], [0], [1], [0, 0, 1, 1], [], []>} : vector<256x128xbf16>, vector<128x256xbf16>, vector<256x256xf32> -> vector<256x256xf32>
    %4 = vector.extract_strided_slice %3 {offsets = [0, 0], sizes = [128, 256], strides = [1, 1]} : vector<256x256xf32> to vector<128x256xf32>
    %5 = vector.extract_strided_slice %3 {offsets = [128, 0], sizes = [128, 256], strides = [1, 1]} : vector<256x256xf32> to vector<128x256xf32>
    %6 = vector.extract_strided_slice %4 {offsets = [0, 0], sizes = [128, 128], strides = [1, 1]} : vector<128x256xf32> to vector<128x128xf32>
    %7 = vector.extract_strided_slice %4 {offsets = [0, 128], sizes = [128, 128], strides = [1, 1]} : vector<128x256xf32> to vector<128x128xf32>
    %8 = vector.extract_strided_slice %5 {offsets = [0, 0], sizes = [128, 128], strides = [1, 1]} : vector<128x256xf32> to vector<128x128xf32>
    %9 = vector.extract_strided_slice %5 {offsets = [0, 128], sizes = [128, 128], strides = [1, 1]} : vector<128x256xf32> to vector<128x128xf32>
    %10 = arith.mulf %6, %6 : vector<128x128xf32>
    %11 = arith.mulf %7, %7 : vector<128x128xf32>
    %12 = arith.addf %10, %11 : vector<128x128xf32>
    %cst_4 = arith.constant 9.99999982E-15 : f32
    %13 = vector.broadcast %cst_4 : f32 to vector<128x128xf32>
    %14 = arith.maximumf %12, %13 : vector<128x128xf32>
    %15 = arith.mulf %8, %8 : vector<128x128xf32>
    %16 = arith.mulf %9, %9 : vector<128x128xf32>
    %17 = arith.addf %15, %16 : vector<128x128xf32>
    %cst_5 = arith.constant 9.99999982E-15 : f32
    %18 = vector.broadcast %cst_5 : f32 to vector<128x128xf32>
    %19 = arith.maximumf %17, %18 : vector<128x128xf32>
    %20 = math.log %14 : vector<128x128xf32>
    %21 = math.log %19 : vector<128x128xf32>
    %cst_6 = arith.constant 2.500000e-01 : f32
    %22 = vector.broadcast %cst_6 : f32 to vector<128x128xf32>
    %23 = arith.mulf %22, %20 : vector<128x128xf32>
    %24 = math.exp %23 : vector<128x128xf32>
    %cst_7 = arith.constant 2.500000e-01 : f32
    %25 = vector.broadcast %cst_7 : f32 to vector<128x128xf32>
    %26 = arith.mulf %25, %21 : vector<128x128xf32>
    %27 = math.exp %26 : vector<128x128xf32>
    %28 = tpu.iota {dimensions = array<i32: 1>} : vector<128x128xi32>
    %29 = tpu.iota {dimensions = array<i32: 0>} : vector<128x128xi32>
    %c128_i32 = arith.constant 128 : i32
    %30 = arith.muli %arg0, %c128_i32 : i32
    %31 = vector.broadcast %30 : i32 to vector<128x128xi32>
    %32 = arith.addi %29, %31 : vector<128x128xi32>
    %c33_i32 = arith.constant 33 : i32
    %33 = vector.broadcast %c33_i32 : i32 to vector<128x128xi32>
    %34 = arith.cmpi slt, %28, %33 : vector<128x128xi32>
    %c34_i32 = arith.constant 34 : i32
    %35 = vector.broadcast %c34_i32 : i32 to vector<128x128xi32>
    %36 = arith.cmpi slt, %32, %35 : vector<128x128xi32>
    %37 = arith.andi %34, %36 : vector<128x128xi1>
    %38 = arith.subf %27, %24 : vector<128x128xf32>
    %39 = arith.mulf %38, %38 : vector<128x128xf32>
    %40 = vector.shape_cast %39 : vector<128x128xf32> to vector<1x128x128xf32>
    %cst_8 = arith.constant dense<0.000000e+00> : vector<1xf32>
    %41 = vector.multi_reduction <add>, %40, %cst_8 [1, 2] : vector<1x128x128xf32> to vector<1xf32>
    %42 = vector.shape_cast %41 : vector<1xf32> to vector<1x1x1xf32>
    %43 = vector.extract %42[0, 0, 0] : f32 from vector<1x1x1xf32>
    %44 = arith.mulf %27, %27 : vector<128x128xf32>
    %cst_9 = arith.constant 0.000000e+00 : f32
    %45 = vector.broadcast %cst_9 : f32 to vector<128x128xf32>
    %46 = arith.select %37, %44, %45 : vector<128x128xi1>, vector<128x128xf32>
    %47 = vector.shape_cast %46 : vector<128x128xf32> to vector<1x128x128xf32>
    %cst_10 = arith.constant dense<0.000000e+00> : vector<1xf32>
    %48 = vector.multi_reduction <add>, %47, %cst_10 [1, 2] : vector<1x128x128xf32> to vector<1xf32>
    %49 = vector.shape_cast %48 : vector<1xf32> to vector<1x1x1xf32>
    %50 = vector.extract %49[0, 0, 0] : f32 from vector<1x1x1xf32>
    %51 = arith.subf %21, %20 : vector<128x128xf32>
    %52 = math.absf %51 : vector<128x128xf32>
    %53 = vector.shape_cast %52 : vector<128x128xf32> to vector<1x128x128xf32>
    %cst_11 = arith.constant dense<0.000000e+00> : vector<1xf32>
    %54 = vector.multi_reduction <add>, %53, %cst_11 [1, 2] : vector<1x128x128xf32> to vector<1xf32>
    %55 = vector.shape_cast %54 : vector<1xf32> to vector<1x1x1xf32>
    %56 = vector.extract %55[0, 0, 0] : f32 from vector<1x1x1xf32>
    %cst_12 = arith.constant 2.500000e-01 : f32
    %57 = arith.mulf %cst_12, %56 : f32
    %58 = tpu.iota {dimensions = array<i32: 1>} : vector<8x128xi32>
    %59 = tpu.iota {dimensions = array<i32: 0>} : vector<8x128xi32>
    %c0_i32 = arith.constant 0 : i32
    %60 = vector.broadcast %c0_i32 : i32 to vector<8x128xi32>
    %61 = arith.cmpi eq, %59, %60 : vector<8x128xi32>
    %c0_i32_13 = arith.constant 0 : i32
    %62 = vector.broadcast %c0_i32_13 : i32 to vector<8x128xi32>
    %63 = arith.cmpi eq, %58, %62 : vector<8x128xi32>
    %64 = arith.andi %61, %63 : vector<8x128xi1>
    %c0_i32_14 = arith.constant 0 : i32
    %65 = vector.broadcast %c0_i32_14 : i32 to vector<8x128xi32>
    %66 = arith.cmpi eq, %59, %65 : vector<8x128xi32>
    %c1_i32 = arith.constant 1 : i32
    %67 = vector.broadcast %c1_i32 : i32 to vector<8x128xi32>
    %68 = arith.cmpi eq, %58, %67 : vector<8x128xi32>
    %69 = arith.andi %66, %68 : vector<8x128xi1>
    %c0_i32_15 = arith.constant 0 : i32
    %70 = vector.broadcast %c0_i32_15 : i32 to vector<8x128xi32>
    %71 = arith.cmpi eq, %59, %70 : vector<8x128xi32>
    %c2_i32 = arith.constant 2 : i32
    %72 = vector.broadcast %c2_i32 : i32 to vector<8x128xi32>
    %73 = arith.cmpi eq, %58, %72 : vector<8x128xi32>
    %74 = arith.andi %71, %73 : vector<8x128xi1>
    %cst_16 = arith.constant 0.000000e+00 : f32
    %75 = vector.broadcast %57 : f32 to vector<8x128xf32>
    %76 = vector.broadcast %cst_16 : f32 to vector<8x128xf32>
    %77 = arith.select %74, %75, %76 : vector<8x128xi1>, vector<8x128xf32>
    %78 = vector.broadcast %50 : f32 to vector<8x128xf32>
    %79 = arith.select %69, %78, %77 : vector<8x128xi1>, vector<8x128xf32>
    %80 = vector.broadcast %43 : f32 to vector<8x128xf32>
    %81 = arith.select %64, %80, %79 : vector<8x128xi1>, vector<8x128xf32>
    %c0_17 = arith.constant 0 : index
    %c0_18 = arith.constant 0 : index
    %c0_19 = arith.constant 0 : index
    %82 = vector.load %arg3[%c0_17, %c0_18, %c0_19] : memref<1x8x128xf32, #tpu.memory_space<vmem>>, vector<1x8x128xf32>
    %83 = vector.shape_cast %82 : vector<1x8x128xf32> to vector<8x128xf32>
    %84 = vector.shape_cast %81 : vector<8x128xf32> to vector<1x8x128xf32>
    tpu.vector_store %arg3[%c0_17, %c0_18, %c0_19], %84 {strides = array<i32>} : memref<1x8x128xf32, #tpu.memory_space<vmem>>, vector<1x8x128xf32>,
    return
  }
  func.func @transform_0(%arg0: i32) -> (i32, i32, i32) {
    %c0_i32 = arith.constant 0 : i32
    %c0_i32_0 = arith.constant 0 : i32
    %c0_i32_1 = arith.constant 0 : i32
    return %c0_i32, %arg0, %c0_i32_0 : i32, i32, i32
  }
  func.func @transform_1(%arg0: i32) -> (i32, i32) {
    %c0_i32 = arith.constant 0 : i32
    %c0_i32_0 = arith.constant 0 : i32
    %c0_i32_1 = arith.constant 0 : i32
    return %c0_i32, %c0_i32_0 : i32, i32
  }
  func.func @transform_2(%arg0: i32) -> (i32, i32, i32) {
    %c0_i32 = arith.constant 0 : i32
    %c0_i32_0 = arith.constant 0 : i32
    %c0_i32_1 = arith.constant 0 : i32
    return %arg0, %c0_i32, %c0_i32_0 : i32, i32, i32
  }
}

</mosaic_0001>

<llo_original>
// kernel: tpu_custom_call.1
$region0: #{tpu_custom_call.1}
  #allocation0 [shape = 'u32[]', space=smem, size = 0x4, offset = 0x4, fixed_abs, tag = 'smem constant byte address 0x4 - core index']
  #allocation1 [shape = 'u32[144,128]{1,0:T(1,128)}', space=vmem, size = 0x12000, scoped, tag = 'internal scratch']
  %s0 = inlined_call_operand.hbm [shape: bf16[2,128,128], index: 0, kind: input, shape index: {}]
  %s1 = inlined_call_operand.hbm [shape: bf16[128,256], index: 1, kind: input, shape index: {}]
  %s2 = inlined_call_operand.hbm [shape: f32[1,8,128], index: 2, kind: output, shape index: {}]
  %s3 = sld [smem:[#allocation0]]
  $region26: #{tpu_custom_call.1} parent=0
    _
  %s5 = ssub.s32 1, %s3
  %s6 = scalar_select 0, %s5, %s3
  $region1: #{tpu_custom_call.1} parent=0
    #allocation2 [shape = 'u8[65536]{0}', space=vmem, size = 0x10000, scoped, tag = 'input window, operand 0, single buffered']
    #allocation3 [shape = 's32[1]{0}', space=sflag, size = 0x4, scoped, tag = 'scoped memory for tpu_custom_call.1']
    #allocation4 [shape = 's32[1]{0}', space=sflag, size = 0x4, scoped, tag = 'scoped memory for tpu_custom_call.1']
    #allocation5 [shape = 'u8[65536]{0}', space=vmem, size = 0x10000, scoped, tag = 'input window, operand 1, single buffered']
    #allocation6 [shape = 's32[1]{0}', space=sflag, size = 0x4, scoped, tag = 'scoped memory for tpu_custom_call.1']
    #allocation7 [shape = 'u8[4096]{0}', space=vmem, size = 0x1000, scoped, tag = 'output window, operand 0, single buffered']
    %7 = vsyncpa [#allocation3], 0
    %8 = vsyncpa [#allocation6], 0
    %9 = vsyncpa [#allocation4], 0
    // Predicated region
    $region2: #{tpu_custom_call.1} parent=1 // pred_check
      _
    $region3: #{tpu_custom_call.1} parent=1 // pred_check_branch
      %11 = sbr.rel (0) target = $region5
    $region4: #{tpu_custom_call.1} parent=1 // pred_region
      %s13 = ssub.s32 2048, 2048
      %14 = vsyncadd [#allocation3], %s13
      %s15 = sshll.u32 [#allocation2], 4
      %s16 = int_to_ptr.vmem [resolvable:$true] %s15
      %21 = dma.hbm_to_vmem [thread:$0]  %s0, 2048, %s16, [#allocation3], 64, 64, 4
    $region5: #{tpu_custom_call.1} parent=1 // pred_fallthru
      _
    // Predicated region
    $region6: #{tpu_custom_call.1} parent=1 // pred_check
      _
    $region7: #{tpu_custom_call.1} parent=1 // pred_check_branch
      %23 = sbr.rel (0) target = $region9
    $region8: #{tpu_custom_call.1} parent=1 // pred_region
      %s25 = ssub.s32 2048, 2048
      %26 = vsyncadd [#allocation6], %s25
      %s27 = sshll.u32 [#allocation5], 4
      %s28 = int_to_ptr.vmem [resolvable:$true] %s27
      %33 = dma.hbm_to_vmem [thread:$0]  %s1, 2048, %s28, [#allocation6], 128, 128, 8
    $region9: #{tpu_custom_call.1} parent=1 // pred_fallthru
      _
    // Predicated region
    $region10: #{tpu_custom_call.1} parent=1 // pred_check
      _
    $region11: #{tpu_custom_call.1} parent=1 // pred_check_branch
      %35 = sbr.rel (0) target = $region13
    $region12: #{tpu_custom_call.1} parent=1 // pred_region
      %36 = dma.done [#allocation3], 2048
    $region13: #{tpu_custom_call.1} parent=1 // pred_fallthru
      _
    // Predicated region
    $region14: #{tpu_custom_call.1} parent=1 // pred_check
      _
    $region15: #{tpu_custom_call.1} parent=1 // pred_check_branch
      %38 = sbr.rel (0) target = $region17
    $region16: #{tpu_custom_call.1} parent=1 // pred_region
      %39 = dma.done [#allocation6], 2048
    $region17: #{tpu_custom_call.1} parent=1 // pred_fallthru
      _
    %v41 = vld [vmem:[#allocation2] sm:$0xf]
    %v42 = vld [vmem:[#allocation2 + $0x4] sm:$0xf]
    %v43 = vld [vmem:[#allocation2 + $0x8] sm:$0xf]
    %v44 = vld [vmem:[#allocation2 + $0xc] sm:$0xf]
    %v45 = vld [vmem:[#allocation2 + $0x10] sm:$0xf]
    %v46 = vld [vmem:[#allocation2 + $0x14] sm:$0xf]
    %v47 = vld [vmem:[#allocation2 + $0x18] sm:$0xf]
    %v48 = vld [vmem:[#allocation2 + $0x1c] sm:$0xf]
    %v49 = vld [vmem:[#allocation2 + $0x20] sm:$0xf]
    %v50 = vld [vmem:[#allocation2 + $0x24] sm:$0xf]
    %v51 = vld [vmem:[#allocation2 + $0x28] sm:$0xf]
    %v52 = vld [vmem:[#allocation2 + $0x2c] sm:$0xf]
    %v53 = vld [vmem:[#allocation2 + $0x30] sm:$0xf]
    %v54 = vld [vmem:[#allocation2 + $0x34] sm:$0xf]
    %v55 = vld [vmem:[#allocation2 + $0x38] sm:$0xf]
    %v56 = vld [vmem:[#allocation2 + $0x3c] sm:$0xf]
    %v57 = vld [vmem:[#allocation2 + $0x40] sm:$0xf]
    %v58 = vld [vmem:[#allocation2 + $0x44] sm:$0xf]
    %v59 = vld [vmem:[#allocation2 + $0x48] sm:$0xf]
    %v60 = vld [vmem:[#allocation2 + $0x4c] sm:$0xf]
    %v61 = vld [vmem:[#allocation2 + $0x50] sm:$0xf]
    %v62 = vld [vmem:[#allocation2 + $0x54] sm:$0xf]
    %v63 = vld [vmem:[#allocation2 + $0x58] sm:$0xf]
    %v64 = vld [vmem:[#allocation2 + $0x5c] sm:$0xf]
    %v65 = vld [vmem:[#allocation2 + $0x60] sm:$0xf]
    %v66 = vld [vmem:[#allocation2 + $0x64] sm:$0xf]
    %v67 = vld [vmem:[#allocation2 + $0x68] sm:$0xf]
    %v68 = vld [vmem:[#allocation2 + $0x6c] sm:$0xf]
    %v69 = vld [vmem:[#allocation2 + $0x70] sm:$0xf]
    %v70 = vld [vmem:[#allocation2 + $0x74] sm:$0xf]
    %v71 = vld [vmem:[#allocation2 + $0x78] sm:$0xf]
    %v72 = vld [vmem:[#allocation2 + $0x7c] sm:$0xf]
    %v73 = vld [vmem:[#allocation5] sm:$0xff]
    %v74 = vld [vmem:[#allocation5 + $0x8] sm:$0xff]
    %v75 = vld [vmem:[#allocation5 + $0x10] sm:$0xff]
    %v76 = vld [vmem:[#allocation5 + $0x18] sm:$0xff]
    %v77 = vld [vmem:[#allocation5 + $0x20] sm:$0xff]
    %v78 = vld [vmem:[#allocation5 + $0x28] sm:$0xff]
    %v79 = vld [vmem:[#allocation5 + $0x30] sm:$0xff]
    %v80 = vld [vmem:[#allocation5 + $0x38] sm:$0xff]
    %v81 = vld [vmem:[#allocation5 + $0x40] sm:$0xff]
    %v82 = vld [vmem:[#allocation5 + $0x48] sm:$0xff]
    %v83 = vld [vmem:[#allocation5 + $0x50] sm:$0xff]
    %v84 = vld [vmem:[#allocation5 + $0x58] sm:$0xff]
    %v85 = vld [vmem:[#allocation5 + $0x60] sm:$0xff]
    %v86 = vld [vmem:[#allocation5 + $0x68] sm:$0xff]
    %v87 = vld [vmem:[#allocation5 + $0x70] sm:$0xff]
    %v88 = vld [vmem:[#allocation5 + $0x78] sm:$0xff]
    %v121 = vunpack.c.l.b16 %v41
    %v122 = vunpack.c.l.b16 %v42
    %v123 = vunpack.c.l.b16 %v43
    %v124 = vunpack.c.l.b16 %v44
    %v125 = vunpack.c.l.b16 %v45
    %v126 = vunpack.c.l.b16 %v46
    %v127 = vunpack.c.l.b16 %v47
    %v128 = vunpack.c.l.b16 %v48
    %v129 = vunpack.c.l.b16 %v49
    %v130 = vunpack.c.l.b16 %v50
    %v131 = vunpack.c.l.b16 %v51
    %v132 = vunpack.c.l.b16 %v52
    %v133 = vunpack.c.l.b16 %v53
    %v134 = vunpack.c.l.b16 %v54
    %v135 = vunpack.c.l.b16 %v55
    %v136 = vunpack.c.l.b16 %v56
    %v137 = vunpack.c.l.b16 %v57
    %v138 = vunpack.c.l.b16 %v58
    %v139 = vunpack.c.l.b16 %v59
    %v140 = vunpack.c.l.b16 %v60
    %v141 = vunpack.c.l.b16 %v61
    %v142 = vunpack.c.l.b16 %v62
    %v143 = vunpack.c.l.b16 %v63
    %v144 = vunpack.c.l.b16 %v64
    %v145 = vunpack.c.l.b16 %v65
    %v146 = vunpack.c.l.b16 %v66
    %v147 = vunpack.c.l.b16 %v67
    %v148 = vunpack.c.l.b16 %v68
    %v149 = vunpack.c.l.b16 %v69
    %v150 = vunpack.c.l.b16 %v70
    %v151 = vunpack.c.l.b16 %v71
    %v152 = vunpack.c.l.b16 %v72
    %v153 = vpack.c.b16 %v122, %v121
    %v154 = vpack.c.b16 %v124, %v123
    %v155 = vpack.c.b16 %v126, %v125
    %v156 = vpack.c.b16 %v128, %v127
    %v157 = vpack.c.b16 %v130, %v129
    %v158 = vpack.c.b16 %v132, %v131
    %v159 = vpack.c.b16 %v134, %v133
    %v160 = vpack.c.b16 %v136, %v135
    %v161 = vpack.c.b16 %v138, %v137
    %v162 = vpack.c.b16 %v140, %v139
    %v163 = vpack.c.b16 %v142, %v141
    %v164 = vpack.c.b16 %v144, %v143
    %v165 = vpack.c.b16 %v146, %v145
    %v166 = vpack.c.b16 %v148, %v147
    %v167 = vpack.c.b16 %v150, %v149
    %v168 = vpack.c.b16 %v152, %v151
    %v201 = vunpack.c.l.b16 %v73
    %v202 = vunpack.c.h.b16 %v73
    %v203 = vunpack.c.l.b16 %v74
    %v204 = vunpack.c.h.b16 %v74
    %v205 = vunpack.c.l.b16 %v75
    %v206 = vunpack.c.h.b16 %v75
    %v207 = vunpack.c.l.b16 %v76
    %v208 = vunpack.c.h.b16 %v76
    %v209 = vunpack.c.l.b16 %v77
    %v210 = vunpack.c.h.b16 %v77
    %v211 = vunpack.c.l.b16 %v78
    %v212 = vunpack.c.h.b16 %v78
    %v213 = vunpack.c.l.b16 %v79
    %v214 = vunpack.c.h.b16 %v79
    %v215 = vunpack.c.l.b16 %v80
    %v216 = vunpack.c.h.b16 %v80
    %v217 = vunpack.c.l.b16 %v81
    %v218 = vunpack.c.h.b16 %v81
    %v219 = vunpack.c.l.b16 %v82
    %v220 = vunpack.c.h.b16 %v82
    %v221 = vunpack.c.l.b16 %v83
    %v222 = vunpack.c.h.b16 %v83
    %v223 = vunpack.c.l.b16 %v84
    %v224 = vunpack.c.h.b16 %v84
    %v225 = vunpack.c.l.b16 %v85
    %v226 = vunpack.c.h.b16 %v85
    %v227 = vunpack.c.l.b16 %v86
    %v228 = vunpack.c.h.b16 %v86
    %v229 = vunpack.c.l.b16 %v87
    %v230 = vunpack.c.h.b16 %v87
    %v231 = vunpack.c.l.b16 %v88
    %v232 = vunpack.c.h.b16 %v88
    %v233 = vpack.c.b16 %v203, %v201
    %v234 = vpack.c.b16 %v204, %v202
    %v235 = vpack.c.b16 %v207, %v205
    %v236 = vpack.c.b16 %v208, %v206
    %v237 = vpack.c.b16 %v211, %v209
    %v238 = vpack.c.b16 %v212, %v210
    %v239 = vpack.c.b16 %v215, %v213
    %v240 = vpack.c.b16 %v216, %v214
    %v241 = vpack.c.b16 %v219, %v217
    %v242 = vpack.c.b16 %v220, %v218
    %v243 = vpack.c.b16 %v223, %v221
    %v244 = vpack.c.b16 %v224, %v222
    %v245 = vpack.c.b16 %v227, %v225
    %v246 = vpack.c.b16 %v228, %v226
    %v247 = vpack.c.b16 %v231, %v229
    %v248 = vpack.c.b16 %v232, %v230
    %265 = vmatprep.subr.bf16.mxu0 %v234
    %266 = vmatpush1.bf16.msra.mxu0 %v233
    %267 = vmatprep.subr.bf16.mxu0 %v236
    %268 = vmatpush1.bf16.msra.mxu0 %v235
    %269 = vmatprep.subr.bf16.mxu0 %v238
    %270 = vmatpush1.bf16.msra.mxu0 %v237
    %271 = vmatprep.subr.bf16.mxu0 %v240
    %272 = vmatpush1.bf16.msra.mxu0 %v239
    %273 = vmatprep.subr.bf16.mxu0 %v242
    %274 = vmatpush1.bf16.msra.mxu0 %v241
    %275 = vmatprep.subr.bf16.mxu0 %v244
    %276 = vmatpush1.bf16.msra.mxu0 %v243
    %277 = vmatprep.subr.bf16.mxu0 %v246
    %278 = vmatpush1.bf16.msra.mxu0 %v245
    %279 = vmatprep.subr.bf16.mxu0 %v248
    %280 = vmatpush1.bf16.msra.mxu0 %v247
    %281 = vmatprep.subr.bf16.mxu0 0
    %282 = vmatpush1.bf16.msra.mxu0 0
    %283 = vmatprep.subr.bf16.mxu0 0
    %284 = vmatpush1.bf16.msra.mxu0 0
    %285 = vmatprep.subr.bf16.mxu0 0
    %286 = vmatpush1.bf16.msra.mxu0 0
    %287 = vmatprep.subr.bf16.mxu0 0
    %288 = vmatpush1.bf16.msra.mxu0 0
    %289 = vmatprep.subr.bf16.mxu0 0
    %290 = vmatpush1.bf16.msra.mxu0 0
    %291 = vmatprep.subr.bf16.mxu0 0
    %292 = vmatpush1.bf16.msra.mxu0 0
    %293 = vmatprep.subr.bf16.mxu0 0
    %294 = vmatpush1.bf16.msra.mxu0 0
    %295 = vmatprep.subr.bf16.mxu0 0
    %296 = vmatpush1.bf16.msra.mxu0 0
    %297 = vmatprep.mubr.bf16.mxu0 0
    %298 = vmatmul.mubr.bf16.gmra.mrb[0].mxu0 %v153
    %v299 = vpop.f32.mrb[0].mxu0
    %v300 = vadd.f32 0.0, %v299
    %v301 = vpop.f32.mrb[0].mxu0
    %v302 = vadd.f32 0.0, %v301
    %v303 = vpop.f32.mrb[0].mxu0
    %v304 = vadd.f32 0.0, %v303
    %v305 = vpop.f32.mrb[0].mxu0
    %v306 = vadd.f32 0.0, %v305
    %307 = vmatprep.mubr.bf16.mxu0 0
    %308 = vmatmul.mubr.bf16.gmra.mrb[0].mxu0 %v154
    %v309 = vpop.f32.mrb[0].mxu0
    %v310 = vadd.f32 0.0, %v309
    %v311 = vpop.f32.mrb[0].mxu0
    %v312 = vadd.f32 0.0, %v311
    %v313 = vpop.f32.mrb[0].mxu0
    %v314 = vadd.f32 0.0, %v313
    %v315 = vpop.f32.mrb[0].mxu0
    %v316 = vadd.f32 0.0, %v315
    %317 = vmatprep.mubr.bf16.mxu0 0
    %318 = vmatmul.mubr.bf16.gmra.mrb[0].mxu0 %v155
    %v319 = vpop.f32.mrb[0].mxu0
    %v320 = vadd.f32 0.0, %v319
    %v321 = vpop.f32.mrb[0].mxu0
    %v322 = vadd.f32 0.0, %v321
    %v323 = vpop.f32.mrb[0].mxu0
    %v324 = vadd.f32 0.0, %v323
    %v325 = vpop.f32.mrb[0].mxu0
    %v326 = vadd.f32 0.0, %v325
    %327 = vmatprep.mubr.bf16.mxu0 0
    %328 = vmatmul.mubr.bf16.gmra.mrb[0].mxu0 %v156
    %v329 = vpop.f32.mrb[0].mxu0
    %v330 = vadd.f32 0.0, %v329
    %v331 = vpop.f32.mrb[0].mxu0
    %v332 = vadd.f32 0.0, %v331
    %v333 = vpop.f32.mrb[0].mxu0
    %v334 = vadd.f32 0.0, %v333
    %v335 = vpop.f32.mrb[0].mxu0
    %v336 = vadd.f32 0.0, %v335
    %337 = vmatprep.mubr.bf16.mxu0 0
    %338 = vmatmul.mubr.bf16.gmra.mrb[0].mxu0 %v157
    %v339 = vpop.f32.mrb[0].mxu0
    %v340 = vadd.f32 0.0, %v339
    %v341 = vpop.f32.mrb[0].mxu0
    %v342 = vadd.f32 0.0, %v341
    %v343 = vpop.f32.mrb[0].mxu0
    %v344 = vadd.f32 0.0, %v343
    %v345 = vpop.f32.mrb[0].mxu0
    %v346 = vadd.f32 0.0, %v345
    %347 = vmatprep.mubr.bf16.mxu0 0
    %348 = vmatmul.mubr.bf16.gmra.mrb[0].mxu0 %v158
    %v349 = vpop.f32.mrb[0].mxu0
    %v350 = vadd.f32 0.0, %v349
    %v351 = vpop.f32.mrb[0].mxu0
    %v352 = vadd.f32 0.0, %v351
    %v353 = vpop.f32.mrb[0].mxu0
    %v354 = vadd.f32 0.0, %v353
    %v355 = vpop.f32.mrb[0].mxu0
    %v356 = vadd.f32 0.0, %v355
    %357 = vmatprep.mubr.bf16.mxu0 0
    %358 = vmatmul.mubr.bf16.gmra.mrb[0].mxu0 %v159
    %v359 = vpop.f32.mrb[0].mxu0
    %v360 = vadd.f32 0.0, %v359
    %v361 = vpop.f32.mrb[0].mxu0
    %v362 = vadd.f32 0.0, %v361
    %v363 = vpop.f32.mrb[0].mxu0
    %v364 = vadd.f32 0.0, %v363
    %v365 = vpop.f32.mrb[0].mxu0
    %v366 = vadd.f32 0.0, %v365
    %367 = vmatprep.mubr.bf16.mxu0 0
    %368 = vmatmul.mubr.bf16.gmra.mrb[0].mxu0 %v160
    %v369 = vpop.f32.mrb[0].mxu0
    %v370 = vadd.f32 0.0, %v369
    %v371 = vpop.f32.mrb[0].mxu0
    %v372 = vadd.f32 0.0, %v371
    %v373 = vpop.f32.mrb[0].mxu0
    %v374 = vadd.f32 0.0, %v373
    %v375 = vpop.f32.mrb[0].mxu0
    %v376 = vadd.f32 0.0, %v375
    %377 = vmatprep.mubr.bf16.mxu0 0
    %378 = vmatmul.mubr.bf16.gmra.mrb[0].mxu0 %v161
    %v379 = vpop.f32.mrb[0].mxu0
    %v380 = vadd.f32 0.0, %v379
    %v381 = vpop.f32.mrb[0].mxu0
    %v382 = vadd.f32 0.0, %v381
    %v383 = vpop.f32.mrb[0].mxu0
    %v384 = vadd.f32 0.0, %v383
    %v385 = vpop.f32.mrb[0].mxu0
    %v386 = vadd.f32 0.0, %v385
    %387 = vmatprep.mubr.bf16.mxu0 0
    %388 = vmatmul.mubr.bf16.gmra.mrb[0].mxu0 %v162
    %v389 = vpop.f32.mrb[0].mxu0
    %v390 = vadd.f32 0.0, %v389
    %v391 = vpop.f32.mrb[0].mxu0
    %v392 = vadd.f32 0.0, %v391
    %v393 = vpop.f32.mrb[0].mxu0
    %v394 = vadd.f32 0.0, %v393
    %v395 = vpop.f32.mrb[0].mxu0
    %v396 = vadd.f32 0.0, %v395
    %397 = vmatprep.mubr.bf16.mxu0 0
    %398 = vmatmul.mubr.bf16.gmra.mrb[0].mxu0 %v163
    %v399 = vpop.f32.mrb[0].mxu0
    %v400 = vadd.f32 0.0, %v399
    %v401 = vpop.f32.mrb[0].mxu0
    %v402 = vadd.f32 0.0, %v401
    %v403 = vpop.f32.mrb[0].mxu0
    %v404 = vadd.f32 0.0, %v403
    %v405 = vpop.f32.mrb[0].mxu0
    %v406 = vadd.f32 0.0, %v405
    %407 = vmatprep.mubr.bf16.mxu0 0
    %408 = vmatmul.mubr.bf16.gmra.mrb[0].mxu0 %v164
    %v409 = vpop.f32.mrb[0].mxu0
    %v410 = vadd.f32 0.0, %v409
    %v411 = vpop.f32.mrb[0].mxu0
    %v412 = vadd.f32 0.0, %v411
    %v413 = vpop.f32.mrb[0].mxu0
    %v414 = vadd.f32 0.0, %v413
    %v415 = vpop.f32.mrb[0].mxu0
    %v416 = vadd.f32 0.0, %v415
    %417 = vmatprep.mubr.bf16.mxu0 0
    %418 = vmatmul.mubr.bf16.gmra.mrb[0].mxu0 %v165
    %v419 = vpop.f32.mrb[0].mxu0
    %v420 = vadd.f32 0.0, %v419
    %v421 = vpop.f32.mrb[0].mxu0
    %v422 = vadd.f32 0.0, %v421
    %v423 = vpop.f32.mrb[0].mxu0
    %v424 = vadd.f32 0.0, %v423
    %v425 = vpop.f32.mrb[0].mxu0
    %v426 = vadd.f32 0.0, %v425
    %427 = vmatprep.mubr.bf16.mxu0 0
    %428 = vmatmul.mubr.bf16.gmra.mrb[0].mxu0 %v166
    %v429 = vpop.f32.mrb[0].mxu0
    %v430 = vadd.f32 0.0, %v429
    %v431 = vpop.f32.mrb[0].mxu0
    %v432 = vadd.f32 0.0, %v431
    %v433 = vpop.f32.mrb[0].mxu0
    %v434 = vadd.f32 0.0, %v433
    %v435 = vpop.f32.mrb[0].mxu0
    %v436 = vadd.f32 0.0, %v435
    %437 = vmatprep.mubr.bf16.mxu0 0
    %438 = vmatmul.mubr.bf16.gmra.mrb[0].mxu0 %v167
    %v439 = vpop.f32.mrb[0].mxu0
    %v440 = vadd.f32 0.0, %v439
    %v441 = vpop.f32.mrb[0].mxu0
    %v442 = vadd.f32 0.0, %v441
    %v443 = vpop.f32.mrb[0].mxu0
    %v444 = vadd.f32 0.0, %v443
    %v445 = vpop.f32.mrb[0].mxu0
    %v446 = vadd.f32 0.0, %v445
    %447 = vmatprep.mubr.bf16.mxu0 0
    %448 = vmatmul.mubr.bf16.gmra.mrb[0].mxu0 %v168
    %v449 = vpop.f32.mrb[0].mxu0
    %v450 = vadd.f32 0.0, %v449
    %v451 = vpop.f32.mrb[0].mxu0
    %v452 = vadd.f32 0.0, %v451
    %v453 = vpop.f32.mrb[0].mxu0
    %v454 = vadd.f32 0.0, %v453
    %v455 = vpop.f32.mrb[0].mxu0
    %v456 = vadd.f32 0.0, %v455
    %457 = vdwg.mxu0
    %v458 = vmul.f32 %v300, %v300
    %v459 = vmul.f32 %v304, %v304
    %v460 = vmul.f32 %v310, %v310
    %v461 = vmul.f32 %v314, %v314
    %v462 = vmul.f32 %v320, %v320
    %v463 = vmul.f32 %v324, %v324
    %v464 = vmul.f32 %v330, %v330
    %v465 = vmul.f32 %v334, %v334
    %v466 = vmul.f32 %v340, %v340
    %v467 = vmul.f32 %v344, %v344
    %v468 = vmul.f32 %v350, %v350
    %v469 = vmul.f32 %v354, %v354
    %v470 = vmul.f32 %v360, %v360
    %v471 = vmul.f32 %v364, %v364
    %v472 = vmul.f32 %v370, %v370
    %v473 = vmul.f32 %v374, %v374
    %v474 = vmul.f32 %v302, %v302
    %v475 = vmul.f32 %v306, %v306
    %v476 = vmul.f32 %v312, %v312
    %v477 = vmul.f32 %v316, %v316
    %v478 = vmul.f32 %v322, %v322
    %v479 = vmul.f32 %v326, %v326
    %v480 = vmul.f32 %v332, %v332
    %v481 = vmul.f32 %v336, %v336
    %v482 = vmul.f32 %v342, %v342
    %v483 = vmul.f32 %v346, %v346
    %v484 = vmul.f32 %v352, %v352
    %v485 = vmul.f32 %v356, %v356
    %v486 = vmul.f32 %v362, %v362
    %v487 = vmul.f32 %v366, %v366
    %v488 = vmul.f32 %v372, %v372
    %v489 = vmul.f32 %v376, %v376
    %v490 = vadd.f32 %v458, %v474
    %v491 = vadd.f32 %v459, %v475
    %v492 = vadd.f32 %v460, %v476
    %v493 = vadd.f32 %v461, %v477
    %v494 = vadd.f32 %v462, %v478
    %v495 = vadd.f32 %v463, %v479
    %v496 = vadd.f32 %v464, %v480
    %v497 = vadd.f32 %v465, %v481
    %v498 = vadd.f32 %v466, %v482
    %v499 = vadd.f32 %v467, %v483
    %v500 = vadd.f32 %v468, %v484
    %v501 = vadd.f32 %v469, %v485
    %v502 = vadd.f32 %v470, %v486
    %v503 = vadd.f32 %v471, %v487
    %v504 = vadd.f32 %v472, %v488
    %v505 = vadd.f32 %v473, %v489
    %v506 = vmax.f32 %v490, 1e-14
    %v507 = vmax.f32 %v491, 1e-14
    %v508 = vmax.f32 %v492, 1e-14
    %v509 = vmax.f32 %v493, 1e-14
    %v510 = vmax.f32 %v494, 1e-14
    %v511 = vmax.f32 %v495, 1e-14
    %v512 = vmax.f32 %v496, 1e-14
    %v513 = vmax.f32 %v497, 1e-14
    %v514 = vmax.f32 %v498, 1e-14
    %v515 = vmax.f32 %v499, 1e-14
    %v516 = vmax.f32 %v500, 1e-14
    %v517 = vmax.f32 %v501, 1e-14
    %v518 = vmax.f32 %v502, 1e-14
    %v519 = vmax.f32 %v503, 1e-14
    %v520 = vmax.f32 %v504, 1e-14
    %v521 = vmax.f32 %v505, 1e-14
    %v522 = vmul.f32 %v380, %v380
    %v523 = vmul.f32 %v384, %v384
    %v524 = vmul.f32 %v390, %v390
    %v525 = vmul.f32 %v394, %v394
    %v526 = vmul.f32 %v400, %v400
    %v527 = vmul.f32 %v404, %v404
    %v528 = vmul.f32 %v410, %v410
    %v529 = vmul.f32 %v414, %v414
    %v530 = vmul.f32 %v420, %v420
    %v531 = vmul.f32 %v424, %v424
    %v532 = vmul.f32 %v430, %v430
    %v533 = vmul.f32 %v434, %v434
    %v534 = vmul.f32 %v440, %v440
    %v535 = vmul.f32 %v444, %v444
    %v536 = vmul.f32 %v450, %v450
    %v537 = vmul.f32 %v454, %v454
    %v538 = vmul.f32 %v382, %v382
    %v539 = vmul.f32 %v386, %v386
    %v540 = vmul.f32 %v392, %v392
    %v541 = vmul.f32 %v396, %v396
    %v542 = vmul.f32 %v402, %v402
    %v543 = vmul.f32 %v406, %v406
    %v544 = vmul.f32 %v412, %v412
    %v545 = vmul.f32 %v416, %v416
    %v546 = vmul.f32 %v422, %v422
    %v547 = vmul.f32 %v426, %v426
    %v548 = vmul.f32 %v432, %v432
    %v549 = vmul.f32 %v436, %v436
    %v550 = vmul.f32 %v442, %v442
    %v551 = vmul.f32 %v446, %v446
    %v552 = vmul.f32 %v452, %v452
    %v553 = vmul.f32 %v456, %v456
    %v554 = vadd.f32 %v522, %v538
    %v555 = vadd.f32 %v523, %v539
    %v556 = vadd.f32 %v524, %v540
    %v557 = vadd.f32 %v525, %v541
    %v558 = vadd.f32 %v526, %v542
    %v559 = vadd.f32 %v527, %v543
    %v560 = vadd.f32 %v528, %v544
    %v561 = vadd.f32 %v529, %v545
    %v562 = vadd.f32 %v530, %v546
    %v563 = vadd.f32 %v531, %v547
    %v564 = vadd.f32 %v532, %v548
    %v565 = vadd.f32 %v533, %v549
    %v566 = vadd.f32 %v534, %v550
    %v567 = vadd.f32 %v535, %v551
    %v568 = vadd.f32 %v536, %v552
    %v569 = vadd.f32 %v537, %v553
    %v570 = vmax.f32 %v554, 1e-14
    %v571 = vmax.f32 %v555, 1e-14
    %v572 = vmax.f32 %v556, 1e-14
    %v573 = vmax.f32 %v557, 1e-14
    %v574 = vmax.f32 %v558, 1e-14
    %v575 = vmax.f32 %v559, 1e-14
    %v576 = vmax.f32 %v560, 1e-14
    %v577 = vmax.f32 %v561, 1e-14
    %v578 = vmax.f32 %v562, 1e-14
    %v579 = vmax.f32 %v563, 1e-14
    %v580 = vmax.f32 %v564, 1e-14
    %v581 = vmax.f32 %v565, 1e-14
    %v582 = vmax.f32 %v566, 1e-14
    %v583 = vmax.f32 %v567, 1e-14
    %v584 = vmax.f32 %v568, 1e-14
    %v585 = vmax.f32 %v569, 1e-14
    %v586 = vlog2.pop %v506
    %v587 = vmul.f32 %v586, 0.6931472
    %v588 = vlog2.pop %v507
    %v589 = vmul.f32 %v588, 0.6931472
    %v590 = vlog2.pop %v508
    %v591 = vmul.f32 %v590, 0.6931472
    %v592 = vlog2.pop %v509
    %v593 = vmul.f32 %v592, 0.6931472
    %v594 = vlog2.pop %v510
    %v595 = vmul.f32 %v594, 0.6931472
    %v596 = vlog2.pop %v511
    %v597 = vmul.f32 %v596, 0.6931472
    %v598 = vlog2.pop %v512
    %v599 = vmul.f32 %v598, 0.6931472
    %v600 = vlog2.pop %v513
    %v601 = vmul.f32 %v600, 0.6931472
    %v602 = vlog2.pop %v514
    %v603 = vmul.f32 %v602, 0.6931472
    %v604 = vlog2.pop %v515
    %v605 = vmul.f32 %v604, 0.6931472
    %v606 = vlog2.pop %v516
    %v607 = vmul.f32 %v606, 0.6931472
    %v608 = vlog2.pop %v517
    %v609 = vmul.f32 %v608, 0.6931472
    %v610 = vlog2.pop %v518
    %v611 = vmul.f32 %v610, 0.6931472
    %v612 = vlog2.pop %v519
    %v613 = vmul.f32 %v612, 0.6931472
    %v614 = vlog2.pop %v520
    %v615 = vmul.f32 %v614, 0.6931472
    %v616 = vlog2.pop %v521
    %v617 = vmul.f32 %v616, 0.6931472
    %v618 = vlog2.pop %v570
    %v619 = vmul.f32 %v618, 0.6931472
    %v620 = vlog2.pop %v571
    %v621 = vmul.f32 %v620, 0.6931472
    %v622 = vlog2.pop %v572
    %v623 = vmul.f32 %v622, 0.6931472
    %v624 = vlog2.pop %v573
    %v625 = vmul.f32 %v624, 0.6931472
    %v626 = vlog2.pop %v574
    %v627 = vmul.f32 %v626, 0.6931472
    %v628 = vlog2.pop %v575
    %v629 = vmul.f32 %v628, 0.6931472
    %v630 = vlog2.pop %v576
    %v631 = vmul.f32 %v630, 0.6931472
    %v632 = vlog2.pop %v577
    %v633 = vmul.f32 %v632, 0.6931472
    %v634 = vlog2.pop %v578
    %v635 = vmul.f32 %v634, 0.6931472
    %v636 = vlog2.pop %v579
    %v637 = vmul.f32 %v636, 0.6931472
    %v638 = vlog2.pop %v580
    %v639 = vmul.f32 %v638, 0.6931472
    %v640 = vlog2.pop %v581
    %v641 = vmul.f32 %v640, 0.6931472
    %v642 = vlog2.pop %v582
    %v643 = vmul.f32 %v642, 0.6931472
    %v644 = vlog2.pop %v583
    %v645 = vmul.f32 %v644, 0.6931472
    %v646 = vlog2.pop %v584
    %v647 = vmul.f32 %v646, 0.6931472
    %v648 = vlog2.pop %v585
    %v649 = vmul.f32 %v648, 0.6931472
    %v650 = vmul.f32 %v587, 0.25
    %v651 = vmul.f32 %v589, 0.25
    %v652 = vmul.f32 %v591, 0.25
    %v653 = vmul.f32 %v593, 0.25
    %v654 = vmul.f32 %v595, 0.25
    %v655 = vmul.f32 %v597, 0.25
    %v656 = vmul.f32 %v599, 0.25
    %v657 = vmul.f32 %v601, 0.25
    %v658 = vmul.f32 %v603, 0.25
    %v659 = vmul.f32 %v605, 0.25
    %v660 = vmul.f32 %v607, 0.25
    %v661 = vmul.f32 %v609, 0.25
    %v662 = vmul.f32 %v611, 0.25
    %v663 = vmul.f32 %v613, 0.25
    %v664 = vmul.f32 %v615, 0.25
    %v665 = vmul.f32 %v617, 0.25
    %v666 = vmul.f32 %v650, 1.442695
    %v667 = vpow.pop %v666
    %v668 = vmul.f32 %v651, 1.442695
    %v669 = vpow.pop %v668
    %v670 = vmul.f32 %v652, 1.442695
    %v671 = vpow.pop %v670
    %v672 = vmul.f32 %v653, 1.442695
    %v673 = vpow.pop %v672
    %v674 = vmul.f32 %v654, 1.442695
    %v675 = vpow.pop %v674
    %v676 = vmul.f32 %v655, 1.442695
    %v677 = vpow.pop %v676
    %v678 = vmul.f32 %v656, 1.442695
    %v679 = vpow.pop %v678
    %v680 = vmul.f32 %v657, 1.442695
    %v681 = vpow.pop %v680
    %v682 = vmul.f32 %v658, 1.442695
    %v683 = vpow.pop %v682
    %v684 = vmul.f32 %v659, 1.442695
    %v685 = vpow.pop %v684
    %v686 = vmul.f32 %v660, 1.442695
    %v687 = vpow.pop %v686
    %v688 = vmul.f32 %v661, 1.442695
    %v689 = vpow.pop %v688
    %v690 = vmul.f32 %v662, 1.442695
    %v691 = vpow.pop %v690
    %v692 = vmul.f32 %v663, 1.442695
    %v693 = vpow.pop %v692
    %v694 = vmul.f32 %v664, 1.442695
    %v695 = vpow.pop %v694
    %v696 = vmul.f32 %v665, 1.442695
    %v697 = vpow.pop %v696
    %v698 = vmul.f32 %v619, 0.25
    %v699 = vmul.f32 %v621, 0.25
    %v700 = vmul.f32 %v623, 0.25
    %v701 = vmul.f32 %v625, 0.25
    %v702 = vmul.f32 %v627, 0.25
    %v703 = vmul.f32 %v629, 0.25
    %v704 = vmul.f32 %v631, 0.25
    %v705 = vmul.f32 %v633, 0.25
    %v706 = vmul.f32 %v635, 0.25
    %v707 = vmul.f32 %v637, 0.25
    %v708 = vmul.f32 %v639, 0.25
    %v709 = vmul.f32 %v641, 0.25
    %v710 = vmul.f32 %v643, 0.25
    %v711 = vmul.f32 %v645, 0.25
    %v712 = vmul.f32 %v647, 0.25
    %v713 = vmul.f32 %v649, 0.25
    %v714 = vmul.f32 %v698, 1.442695
    %v715 = vpow.pop %v714
    %v716 = vmul.f32 %v699, 1.442695
    %v717 = vpow.pop %v716
    %v718 = vmul.f32 %v700, 1.442695
    %v719 = vpow.pop %v718
    %v720 = vmul.f32 %v701, 1.442695
    %v721 = vpow.pop %v720
    %v722 = vmul.f32 %v702, 1.442695
    %v723 = vpow.pop %v722
    %v724 = vmul.f32 %v703, 1.442695
    %v725 = vpow.pop %v724
    %v726 = vmul.f32 %v704, 1.442695
    %v727 = vpow.pop %v726
    %v728 = vmul.f32 %v705, 1.442695
    %v729 = vpow.pop %v728
    %v730 = vmul.f32 %v706, 1.442695
    %v731 = vpow.pop %v730
    %v732 = vmul.f32 %v707, 1.442695
    %v733 = vpow.pop %v732
    %v734 = vmul.f32 %v708, 1.442695
    %v735 = vpow.pop %v734
    %v736 = vmul.f32 %v709, 1.442695
    %v737 = vpow.pop %v736
    %v738 = vmul.f32 %v710, 1.442695
    %v739 = vpow.pop %v738
    %v740 = vmul.f32 %v711, 1.442695
    %v741 = vpow.pop %v740
    %v742 = vmul.f32 %v712, 1.442695
    %v743 = vpow.pop %v742
    %v744 = vmul.f32 %v713, 1.442695
    %v745 = vpow.pop %v744
    %v746 = vlaneseq
    %v747 = vand.u32 %v746, 127
    %v748 = vlaneseq
    %v749 = vshrl.u32 %v748, 7
    %v750 = vadd.s32 %v749, 8
    %v751 = vadd.s32 %v749, 16
    %v752 = vadd.s32 %v749, 24
    %v753 = vadd.s32 %v749, 32
    %v754 = vadd.s32 %v749, 40
    %v755 = vadd.s32 %v749, 48
    %v756 = vadd.s32 %v749, 56
    %v757 = vadd.s32 %v749, 64
    %v758 = vadd.s32 %v749, 72
    %v759 = vadd.s32 %v749, 80
    %v760 = vadd.s32 %v749, 88
    %v761 = vadd.s32 %v749, 96
    %v762 = vadd.s32 %v749, 104
    %v763 = vadd.s32 %v749, 112
    %v764 = vadd.s32 %v749, 120
    %s765 = smul.u32 0, 128
    %v766 = vstv %s765
    %v767 = vadd.s32 %v749, %v766
    %v768 = vadd.s32 %v750, %v766
    %v769 = vadd.s32 %v751, %v766
    %v770 = vadd.s32 %v752, %v766
    %v771 = vadd.s32 %v753, %v766
    %v772 = vadd.s32 %v754, %v766
    %v773 = vadd.s32 %v755, %v766
    %v774 = vadd.s32 %v756, %v766
    %v775 = vadd.s32 %v757, %v766
    %v776 = vadd.s32 %v758, %v766
    %v777 = vadd.s32 %v759, %v766
    %v778 = vadd.s32 %v760, %v766
    %v779 = vadd.s32 %v761, %v766
    %v780 = vadd.s32 %v762, %v766
    %v781 = vadd.s32 %v763, %v766
    %v782 = vadd.s32 %v764, %v766
    %vm783 = vcmp.lt.s32.totalorder %v747, 33
    %vm784 = vcmp.lt.s32.totalorder %v767, 34
    %vm785 = vcmp.lt.s32.totalorder %v768, 34
    %vm786 = vcmp.lt.s32.totalorder %v769, 34
    %vm787 = vcmp.lt.s32.totalorder %v770, 34
    %vm788 = vcmp.lt.s32.totalorder %v771, 34
    %vm789 = vcmp.lt.s32.totalorder %v772, 34
    %vm790 = vcmp.lt.s32.totalorder %v773, 34
    %vm791 = vcmp.lt.s32.totalorder %v774, 34
    %vm792 = vcmp.lt.s32.totalorder %v775, 34
    %vm793 = vcmp.lt.s32.totalorder %v776, 34
    %vm794 = vcmp.lt.s32.totalorder %v777, 34
    %vm795 = vcmp.lt.s32.totalorder %v778, 34
    %vm796 = vcmp.lt.s32.totalorder %v779, 34
    %vm797 = vcmp.lt.s32.totalorder %v780, 34
    %vm798 = vcmp.lt.s32.totalorder %v781, 34
    %vm799 = vcmp.lt.s32.totalorder %v782, 34
    %vm800 = vmand %vm783, %vm784
    %vm801 = vmand %vm783, %vm785
    %vm802 = vmand %vm783, %vm786
    %vm803 = vmand %vm783, %vm787
    %vm804 = vmand %vm783, %vm788
    %vm805 = vmand %vm783, %vm789
    %vm806 = vmand %vm783, %vm790
    %vm807 = vmand %vm783, %vm791
    %vm808 = vmand %vm783, %vm792
    %vm809 = vmand %vm783, %vm793
    %vm810 = vmand %vm783, %vm794
    %vm811 = vmand %vm783, %vm795
    %vm812 = vmand %vm783, %vm796
    %vm813 = vmand %vm783, %vm797
    %vm814 = vmand %vm783, %vm798
    %vm815 = vmand %vm783, %vm799
    %v816 = vsub.f32 %v715, %v667
    %v817 = vsub.f32 %v717, %v669
    %v818 = vsub.f32 %v719, %v671
    %v819 = vsub.f32 %v721, %v673
    %v820 = vsub.f32 %v723, %v675
    %v821 = vsub.f32 %v725, %v677
    %v822 = vsub.f32 %v727, %v679
    %v823 = vsub.f32 %v729, %v681
    %v824 = vsub.f32 %v731, %v683
    %v825 = vsub.f32 %v733, %v685
    %v826 = vsub.f32 %v735, %v687
    %v827 = vsub.f32 %v737, %v689
    %v828 = vsub.f32 %v739, %v691
    %v829 = vsub.f32 %v741, %v693
    %v830 = vsub.f32 %v743, %v695
    %v831 = vsub.f32 %v745, %v697
    %v832 = vmul.f32 %v816, %v816
    %v833 = vmul.f32 %v817, %v817
    %v834 = vmul.f32 %v818, %v818
    %v835 = vmul.f32 %v819, %v819
    %v836 = vmul.f32 %v820, %v820
    %v837 = vmul.f32 %v821, %v821
    %v838 = vmul.f32 %v822, %v822
    %v839 = vmul.f32 %v823, %v823
    %v840 = vmul.f32 %v824, %v824
    %v841 = vmul.f32 %v825, %v825
    %v842 = vmul.f32 %v826, %v826
    %v843 = vmul.f32 %v827, %v827
    %v844 = vmul.f32 %v828, %v828
    %v845 = vmul.f32 %v829, %v829
    %v846 = vmul.f32 %v830, %v830
    %v847 = vmul.f32 %v831, %v831
    %v848 = vadd.f32 %v832, %v833
    %v849 = vadd.f32 %v848, %v834
    %v850 = vadd.f32 %v849, %v835
    %v851 = vadd.f32 %v850, %v836
    %v852 = vadd.f32 %v851, %v837
    %v853 = vadd.f32 %v852, %v838
    %v854 = vadd.f32 %v853, %v839
    %v855 = vadd.f32 %v854, %v840
    %v856 = vadd.f32 %v855, %v841
    %v857 = vadd.f32 %v856, %v842
    %v858 = vadd.f32 %v857, %v843
    %v859 = vadd.f32 %v858, %v844
    %v860 = vadd.f32 %v859, %v845
    %v861 = vadd.f32 %v860, %v846
    %v862 = vadd.f32 %v861, %v847
    %863 = vadd.xlane.f32.xlu0 %v862
    %v864 = vpop.xlane.xlu0 %863
    %v865 = vrot.slane %v864, 4
    %v866 = vadd.f32 %v864, %v865
    %v867 = vrot.slane %v866, 2
    %v868 = vadd.f32 %v866, %v867
    %v869 = vrot.slane %v868, 1
    %v870 = vadd.f32 %v868, %v869
    %s871 = vtos %v870
    %v872 = vmul.f32 %v715, %v715
    %v873 = vmul.f32 %v717, %v717
    %v874 = vmul.f32 %v719, %v719
    %v875 = vmul.f32 %v721, %v721
    %v876 = vmul.f32 %v723, %v723
    %v877 = vmul.f32 %v725, %v725
    %v878 = vmul.f32 %v727, %v727
    %v879 = vmul.f32 %v729, %v729
    %v880 = vmul.f32 %v731, %v731
    %v881 = vmul.f32 %v733, %v733
    %v882 = vmul.f32 %v735, %v735
    %v883 = vmul.f32 %v737, %v737
    %v884 = vmul.f32 %v739, %v739
    %v885 = vmul.f32 %v741, %v741
    %v886 = vmul.f32 %v743, %v743
    %v887 = vmul.f32 %v745, %v745
    %v888 = vsel %vm800, %v872, 0.0
    %v889 = vsel %vm801, %v873, 0.0
    %v890 = vsel %vm802, %v874, 0.0
    %v891 = vsel %vm803, %v875, 0.0
    %v892 = vsel %vm804, %v876, 0.0
    %v893 = vsel %vm805, %v877, 0.0
    %v894 = vsel %vm806, %v878, 0.0
    %v895 = vsel %vm807, %v879, 0.0
    %v896 = vsel %vm808, %v880, 0.0
    %v897 = vsel %vm809, %v881, 0.0
    %v898 = vsel %vm810, %v882, 0.0
    %v899 = vsel %vm811, %v883, 0.0
    %v900 = vsel %vm812, %v884, 0.0
    %v901 = vsel %vm813, %v885, 0.0
    %v902 = vsel %vm814, %v886, 0.0
    %v903 = vsel %vm815, %v887, 0.0
    %v904 = vadd.f32 %v888, %v889
    %v905 = vadd.f32 %v904, %v890
    %v906 = vadd.f32 %v905, %v891
    %v907 = vadd.f32 %v906, %v892
    %v908 = vadd.f32 %v907, %v893
    %v909 = vadd.f32 %v908, %v894
    %v910 = vadd.f32 %v909, %v895
    %v911 = vadd.f32 %v910, %v896
    %v912 = vadd.f32 %v911, %v897
    %v913 = vadd.f32 %v912, %v898
    %v914 = vadd.f32 %v913, %v899
    %v915 = vadd.f32 %v914, %v900
    %v916 = vadd.f32 %v915, %v901
    %v917 = vadd.f32 %v916, %v902
    %v918 = vadd.f32 %v917, %v903
    %919 = vadd.xlane.f32.xlu0 %v918
    %v920 = vpop.xlane.xlu0 %919
    %v921 = vrot.slane %v920, 4
    %v922 = vadd.f32 %v920, %v921
    %v923 = vrot.slane %v922, 2
    %v924 = vadd.f32 %v922, %v923
    %v925 = vrot.slane %v924, 1
    %v926 = vadd.f32 %v924, %v925
    %s927 = vtos %v926
    %v928 = vsub.f32 %v619, %v587
    %v929 = vsub.f32 %v621, %v589
    %v930 = vsub.f32 %v623, %v591
    %v931 = vsub.f32 %v625, %v593
    %v932 = vsub.f32 %v627, %v595
    %v933 = vsub.f32 %v629, %v597
    %v934 = vsub.f32 %v631, %v599
    %v935 = vsub.f32 %v633, %v601
    %v936 = vsub.f32 %v635, %v603
    %v937 = vsub.f32 %v637, %v605
    %v938 = vsub.f32 %v639, %v607
    %v939 = vsub.f32 %v641, %v609
    %v940 = vsub.f32 %v643, %v611
    %v941 = vsub.f32 %v645, %v613
    %v942 = vsub.f32 %v647, %v615
    %v943 = vsub.f32 %v649, %v617
    %v944 = vand.u32 2147483647, %v928
    %v945 = vand.u32 2147483647, %v929
    %v946 = vand.u32 2147483647, %v930
    %v947 = vand.u32 2147483647, %v931
    %v948 = vand.u32 2147483647, %v932
    %v949 = vand.u32 2147483647, %v933
    %v950 = vand.u32 2147483647, %v934
    %v951 = vand.u32 2147483647, %v935
    %v952 = vand.u32 2147483647, %v936
    %v953 = vand.u32 2147483647, %v937
    %v954 = vand.u32 2147483647, %v938
    %v955 = vand.u32 2147483647, %v939
    %v956 = vand.u32 2147483647, %v940
    %v957 = vand.u32 2147483647, %v941
    %v958 = vand.u32 2147483647, %v942
    %v959 = vand.u32 2147483647, %v943
    %v960 = vadd.f32 %v944, %v945
    %v961 = vadd.f32 %v960, %v946
    %v962 = vadd.f32 %v961, %v947
    %v963 = vadd.f32 %v962, %v948
    %v964 = vadd.f32 %v963, %v949
    %v965 = vadd.f32 %v964, %v950
    %v966 = vadd.f32 %v965, %v951
    %v967 = vadd.f32 %v966, %v952
    %v968 = vadd.f32 %v967, %v953
    %v969 = vadd.f32 %v968, %v954
    %v970 = vadd.f32 %v969, %v955
    %v971 = vadd.f32 %v970, %v956
    %v972 = vadd.f32 %v971, %v957
    %v973 = vadd.f32 %v972, %v958
    %v974 = vadd.f32 %v973, %v959
    %975 = vadd.xlane.f32.xlu0 %v974
    %v976 = vpop.xlane.xlu0 %975
    %v977 = vrot.slane %v976, 4
    %v978 = vadd.f32 %v976, %v977
    %v979 = vrot.slane %v978, 2
    %v980 = vadd.f32 %v978, %v979
    %v981 = vrot.slane %v980, 1
    %v982 = vadd.f32 %v980, %v981
    %s983 = vtos %v982
    %s984 = smul.f32 %s983, 0.25
    %vm985 = vcmp.eq.s32.totalorder %v749, 0
    %vm986 = vcmp.eq.s32.totalorder %v747, 0
    %vm987 = vmand %vm985, %vm986
    %vm988 = vcmp.eq.s32.totalorder %v747, 1
    %vm989 = vmand %vm985, %vm988
    %vm990 = vcmp.eq.s32.totalorder %v747, 2
    %vm991 = vmand %vm985, %vm990
    %v992 = vstv %s984
    %v993 = vsel %vm991, %v992, 0.0
    %v994 = vstv %s927
    %v995 = vsel %vm989, %v994, %v993
    %v996 = vstv %s871
    %v997 = vsel %vm987, %v996, %v995
    %998 = vst [vmem:[#allocation7] sm:$0xff] %v997
    // Predicated region
    $region18: #{tpu_custom_call.1} parent=1 // pred_check
      _
    $region19: #{tpu_custom_call.1} parent=1 // pred_check_branch
      %1000 = sbr.rel (0) target = $region21
    $region20: #{tpu_custom_call.1} parent=1 // pred_region
      %s1002 = ssub.s32 128, 128
      %1003 = vsyncadd [#allocation4], %s1002
      %s1005 = sshll.u32 [#allocation7], 4
      %s1006 = int_to_ptr.vmem [resolvable:$true] %s1005
      %1008 = dma.vmem_to_hbm [thread:$0]  %s1006, 128, %s2, [#allocation4]
    $region21: #{tpu_custom_call.1} parent=1 // pred_fallthru
      _
    // Predicated region
    $region22: #{tpu_custom_call.1} parent=1 // pred_check
      _
    $region23: #{tpu_custom_call.1} parent=1 // pred_check_branch
      %1010 = sbr.rel (0) target = $region25
    $region24: #{tpu_custom_call.1} parent=1 // pred_region
      %1011 = dma.done [#allocation4], 128
    $region25: #{tpu_custom_call.1} parent=1 // pred_fallthru
      _
    %1012 = vsyncpa [#allocation3], 1
    %1013 = vsyncpa [#allocation6], 1
    %1014 = vsyncpa [#allocation4], 1

</llo_original>
